<compile_context>
chip_gen: v7x
topology: tpu7x:2x2x1
jax: 0.10.0
libtpu: 0.0.40
codegen_flags: <defaults>
</compile_context>

<pallas_src>
import jax
import jax.numpy as jnp
from jax.experimental import pallas as pl
from jax.experimental.pallas import tpu as pltpu

IN_DIM = 48 * 4 * 4          # 768
HID = 100
OUT = 10
HID_PAD = 128                # pad 100 -> 128 lanes
OUT_PAD = 128                # pad 10  -> 128 lanes (slice to 10 outside the kernel)
BN_EPS = 1e-5
MAX_TB = 2048                # max batch tile (rows per grid step)


def _round_up(n, m):
    return ((n + m - 1) // m) * m


# --------------------------------------------------------------------------- kernel

def _mlp_kernel(x_ref, w1_ref, b1_ref, w2_ref, b2_ref, w3_ref, b3_ref, o_ref):
    # x arrives f32 straight from HBM; cast to bf16 in-kernel (VPU, free here) so the
    # MXU runs its fast bf16 path. Accumulation / bias / ReLU stay f32 (v5e-safe).
    x = x_ref[...].astype(jnp.bfloat16)

    h = jnp.dot(x, w1_ref[...], preferred_element_type=jnp.float32) + b1_ref[...]
    h = jnp.maximum(h, 0.0)

    h = jnp.dot(h.astype(jnp.bfloat16), w2_ref[...],
                preferred_element_type=jnp.float32) + b2_ref[...]
    h = jnp.maximum(h, 0.0)

    o = jnp.dot(h.astype(jnp.bfloat16), w3_ref[...],
                preferred_element_type=jnp.float32) + b3_ref[...]
    o_ref[...] = o.astype(o_ref.dtype)        # bf16, 128-lane dense store


# ------------------------------------------------------------------ parameter prep

def _pad_mat(w, rows, cols):
    out = jnp.zeros((rows, cols), jnp.float32)
    return out.at[: w.shape[0], : w.shape[1]].set(w)


def _pad_row(v, n):
    out = jnp.zeros((1, n), jnp.float32)
    return out.at[0, : v.shape[0]].set(v)


def prepare_params(p):
    """One-time: fold eval-mode BN into the Linears, pad to 128 lanes, cast W to bf16."""
    s1 = p["g1"] * jax.lax.rsqrt(p["v1"] + BN_EPS)
    w1 = p["w1"] * s1[None, :]
    b1 = (p["b1"] - p["m1"]) * s1 + p["be1"]

    s2 = p["g2"] * jax.lax.rsqrt(p["v2"] + BN_EPS)
    w2 = p["w2"] * s2[None, :]
    b2 = (p["b2"] - p["m2"]) * s2 + p["be2"]

    return (
        _pad_mat(w1, IN_DIM, HID_PAD).astype(jnp.bfloat16),
        _pad_row(b1, HID_PAD),
        _pad_mat(w2, HID_PAD, HID_PAD).astype(jnp.bfloat16),
        _pad_row(b2, HID_PAD),
        _pad_mat(p["w3"], HID_PAD, OUT_PAD).astype(jnp.bfloat16),
        _pad_row(p["b3"], OUT_PAD),
    )


def init_params(key):
    """Deterministic PyTorch-default-style init + non-trivial BN running stats."""
    ks = jax.random.split(key, 14)

    def lin(kw, kb, fan_in, fan_out):
        bound = 1.0 / jnp.sqrt(float(fan_in))
        w = jax.random.uniform(kw, (fan_in, fan_out), jnp.float32, -bound, bound)
        b = jax.random.uniform(kb, (fan_out,), jnp.float32, -bound, bound)
        return w, b

    w1, b1 = lin(ks[0], ks[1], IN_DIM, HID)
    w2, b2 = lin(ks[2], ks[3], HID, HID)
    w3, b3 = lin(ks[4], ks[5], HID, OUT)

    def bn(kg, kb, km, kv, n):
        g = jax.random.uniform(kg, (n,), jnp.float32, 0.5, 1.5)
        be = 0.1 * jax.random.normal(kb, (n,), jnp.float32)
        m = 0.1 * jax.random.normal(km, (n,), jnp.float32)
        v = jax.random.uniform(kv, (n,), jnp.float32, 0.5, 1.5)
        return g, be, m, v

    g1, be1, m1, v1 = bn(ks[6], ks[7], ks[8], ks[9], HID)
    g2, be2, m2, v2 = bn(ks[10], ks[11], ks[12], ks[13], HID)

    return dict(w1=w1, b1=b1, g1=g1, be1=be1, m1=m1, v1=v1,
                w2=w2, b2=b2, g2=g2, be2=be2, m2=m2, v2=v2,
                w3=w3, b3=b3)


# ----------------------------------------------------------------------- forward

def _choose_tb(B):
    """Batch tile: big (amortize per-step overhead), multiple of 32, >= 2 steps when
    the batch is large enough (lets the parallel axis shard across v7x's 2 TCs)."""
    if B <= 32:
        return _round_up(max(B, 1), 8)
    tb = min(MAX_TB, _round_up(B, 32))
    if B >= 512 and pl.cdiv(B, tb) < 2:
        tb = _round_up(pl.cdiv(B, 2), 32)
    return tb


def man_discriminator_forward(x, prepared):
    """x: [B, 768] float32 -> logits [B, 10] float32."""
    B = x.shape[0]
    assert x.shape[1] == IN_DIM
    # ReverseLayerF: identity in the forward pass.

    w1, b1, w2, b2, w3, b3 = prepared

    tb = _choose_tb(B)
    grid = (pl.cdiv(B, tb),)              # ragged last tile handled by Pallas masking
    const2 = lambda i: (0, 0)
    resident = dict(pipeline_mode=pl.Buffered(1))   # params: DMA once, single buffer

    flops = 2 * B * (IN_DIM * HID_PAD + HID_PAD * HID_PAD + HID_PAD * OUT_PAD)
    bytes_accessed = (B * IN_DIM * 4 + B * OUT_PAD * 2
                      + (w1.size + w2.size + w3.size) * 2
                      + (b1.size + b2.size + b3.size) * 4)

    out_padded = pl.pallas_call(
        _mlp_kernel,
        out_shape=jax.ShapeDtypeStruct((B, OUT_PAD), jnp.bfloat16),
        grid=grid,
        in_specs=[
            pl.BlockSpec((tb, IN_DIM), lambda i: (i, 0)),               # streamed x tiles (f32)
            pl.BlockSpec((IN_DIM, HID_PAD), const2, **resident),        # resident weights
            pl.BlockSpec((1, HID_PAD), const2, **resident),
            pl.BlockSpec((HID_PAD, HID_PAD), const2, **resident),
            pl.BlockSpec((1, HID_PAD), const2, **resident),
            pl.BlockSpec((HID_PAD, OUT_PAD), const2, **resident),
            pl.BlockSpec((1, OUT_PAD), const2, **resident),
        ],
        out_specs=pl.BlockSpec((tb, OUT_PAD), lambda i: (i, 0)),
        compiler_params=pltpu.CompilerParams(
            dimension_semantics=("parallel",),
            vmem_limit_bytes=48 * 1024 * 1024,   # safe on v7x (64 MiB phys) and v5e/v6e
        ),
        cost_estimate=pl.CostEstimate(
            flops=int(flops), transcendentals=0, bytes_accessed=int(bytes_accessed)),
    )(x, w1, b1, w2, b2, w3, b3)

    # Lane-dense bf16 slab -> slice the 10 real logits and upcast (tiny op).
    return out_padded[:, :OUT].astype(jnp.float32)


# ---------------------------------------------------------------------- references

def _reference_bf16(x, prepared):
    """Matches the kernel's arithmetic (bf16 operands, f32 accumulation, bf16 store)."""
    w1, b1, w2, b2, w3, b3 = prepared
    h = jnp.dot(x.astype(jnp.bfloat16), w1, preferred_element_type=jnp.float32) + b1
    h = jnp.maximum(h, 0.0)
    h = jnp.dot(h.astype(jnp.bfloat16), w2, preferred_element_type=jnp.float32) + b2
    h = jnp.maximum(h, 0.0)
    o = jnp.dot(h.astype(jnp.bfloat16), w3, preferred_element_type=jnp.float32) + b3
    return o.astype(jnp.bfloat16).astype(jnp.float32)[:, :OUT]


def _reference_f32(x, p):
    """Straight f32 port of the PyTorch eval-mode module."""
    h = x @ p["w1"] + p["b1"]
    h = (h - p["m1"]) * jax.lax.rsqrt(p["v1"] + BN_EPS) * p["g1"] + p["be1"]
    h = jnp.maximum(h, 0.0)
    h = h @ p["w2"] + p["b2"]
    h = (h - p["m2"]) * jax.lax.rsqrt(p["v2"] + BN_EPS) * p["g2"] + p["be2"]
    h = jnp.maximum(h, 0.0)
    return h @ p["w3"] + p["b3"]


if __name__ == "__main__":
    key = jax.random.PRNGKey(0)
    k_x, k_p = jax.random.split(key)

    B = 8
    x = jax.random.normal(k_x, (B, IN_DIM), jnp.float32)
    params = init_params(k_p)
    prepared = prepare_params(params)          # one-time fold + pad + bf16 cast

    out = man_discriminator_forward(x, prepared)
    out = jax.block_until_ready(out)
    assert out.shape == (B, OUT), out.shape

    ref_bf16 = _reference_bf16(x, prepared)
    assert jnp.allclose(out, ref_bf16, atol=2e-2, rtol=2e-2), "mismatch vs bf16 reference"

    ref_f32 = _reference_f32(x, params)
    assert jnp.allclose(out, ref_f32, atol=1e-1, rtol=1e-1), "mismatch vs f32 reference"

    print("KERNEL_OK")
</pallas_src>

<mosaic_0001>
module attributes {stable_mosaic.version = 11 : i64} {
  func.func @_mlp_kernel(%arg0: i32, %arg1: memref<8x768xf32, #tpu.memory_space<vmem>>, %arg2: memref<768x128xbf16, #tpu.memory_space<vmem>>, %arg3: memref<1x128xf32, #tpu.memory_space<vmem>>, %arg4: memref<128x128xbf16, #tpu.memory_space<vmem>>, %arg5: memref<1x128xf32, #tpu.memory_space<vmem>>, %arg6: memref<128x128xbf16, #tpu.memory_space<vmem>>, %arg7: memref<1x128xf32, #tpu.memory_space<vmem>>, %arg8: memref<8x128xbf16, #tpu.memory_space<vmem>>) attributes {dimension_semantics = [#tpu.dimension_semantics<parallel>], iteration_bounds = array<i64: 1>, scalar_prefetch = 0 : i64, scratch_operands = 0 : i64, tpu.core_type = #tpu.core_type<tc>, window_params = [{transform_indices = @transform_0, window_bounds = array<i64: 8, 768>}, {pipeline_mode = #tpu.pipeline_mode<synchronous>, transform_indices = @transform_1, window_bounds = array<i64: 768, 128>}, {pipeline_mode = #tpu.pipeline_mode<synchronous>, transform_indices = @transform_2, window_bounds = array<i64: 1, 128>}, {pipeline_mode = #tpu.pipeline_mode<synchronous>, transform_indices = @transform_3, window_bounds = array<i64: 128, 128>}, {pipeline_mode = #tpu.pipeline_mode<synchronous>, transform_indices = @transform_4, window_bounds = array<i64: 1, 128>}, {pipeline_mode = #tpu.pipeline_mode<synchronous>, transform_indices = @transform_5, window_bounds = array<i64: 128, 128>}, {pipeline_mode = #tpu.pipeline_mode<synchronous>, transform_indices = @transform_6, window_bounds = array<i64: 1, 128>}, {transform_indices = @transform_7, window_bounds = array<i64: 8, 128>}]} {
    %c0 = arith.constant 0 : index
    %c0_0 = arith.constant 0 : index
    %0 = vector.load %arg1[%c0, %c0_0] : memref<8x768xf32, #tpu.memory_space<vmem>>, vector<8x768xf32>
    %1 = arith.truncf %0 : vector<8x768xf32> to vector<8x768xbf16>
    %c0_1 = arith.constant 0 : index
    %c0_2 = arith.constant 0 : index
    %2 = vector.load %arg2[%c0_1, %c0_2] : memref<768x128xbf16, #tpu.memory_space<vmem>>, vector<768x128xbf16>
    %cst = arith.constant dense<0.000000e+00> : vector<8x128xf32>
    %3 = tpu.matmul %1, %2, %cst {dimension_numbers = #tpu.dot_dimension_numbers<[1], [0], [0], [1], [0, 0, 1, 1], [], []>} : vector<8x768xbf16>, vector<768x128xbf16>, vector<8x128xf32> -> vector<8x128xf32>
    %c0_3 = arith.constant 0 : index
    %c0_4 = arith.constant 0 : index
    %4 = vector.load %arg3[%c0_3, %c0_4] : memref<1x128xf32, #tpu.memory_space<vmem>>, vector<1x128xf32>
    %5 = vector.broadcast %4 : vector<1x128xf32> to vector<8x128xf32>
    %6 = arith.addf %3, %5 : vector<8x128xf32>
    %cst_5 = arith.constant 0.000000e+00 : f32
    %7 = vector.broadcast %cst_5 : f32 to vector<8x128xf32>
    %8 = arith.maximumf %6, %7 : vector<8x128xf32>
    %9 = arith.truncf %8 : vector<8x128xf32> to vector<8x128xbf16>
    %c0_6 = arith.constant 0 : index
    %c0_7 = arith.constant 0 : index
    %10 = vector.load %arg4[%c0_6, %c0_7] : memref<128x128xbf16, #tpu.memory_space<vmem>>, vector<128x128xbf16>
    %cst_8 = arith.constant dense<0.000000e+00> : vector<8x128xf32>
    %11 = tpu.matmul %9, %10, %cst_8 {dimension_numbers = #tpu.dot_dimension_numbers<[1], [0], [0], [1], [0, 0, 1, 1], [], []>} : vector<8x128xbf16>, vector<128x128xbf16>, vector<8x128xf32> -> vector<8x128xf32>
    %c0_9 = arith.constant 0 : index
    %c0_10 = arith.constant 0 : index
    %12 = vector.load %arg5[%c0_9, %c0_10] : memref<1x128xf32, #tpu.memory_space<vmem>>, vector<1x128xf32>
    %13 = vector.broadcast %12 : vector<1x128xf32> to vector<8x128xf32>
    %14 = arith.addf %11, %13 : vector<8x128xf32>
    %cst_11 = arith.constant 0.000000e+00 : f32
    %15 = vector.broadcast %cst_11 : f32 to vector<8x128xf32>
    %16 = arith.maximumf %14, %15 : vector<8x128xf32>
    %17 = arith.truncf %16 : vector<8x128xf32> to vector<8x128xbf16>
    %c0_12 = arith.constant 0 : index
    %c0_13 = arith.constant 0 : index
    %18 = vector.load %arg6[%c0_12, %c0_13] : memref<128x128xbf16, #tpu.memory_space<vmem>>, vector<128x128xbf16>
    %cst_14 = arith.constant dense<0.000000e+00> : vector<8x128xf32>
    %19 = tpu.matmul %17, %18, %cst_14 {dimension_numbers = #tpu.dot_dimension_numbers<[1], [0], [0], [1], [0, 0, 1, 1], [], []>} : vector<8x128xbf16>, vector<128x128xbf16>, vector<8x128xf32> -> vector<8x128xf32>
    %c0_15 = arith.constant 0 : index
    %c0_16 = arith.constant 0 : index
    %20 = vector.load %arg7[%c0_15, %c0_16] : memref<1x128xf32, #tpu.memory_space<vmem>>, vector<1x128xf32>
    %21 = vector.broadcast %20 : vector<1x128xf32> to vector<8x128xf32>
    %22 = arith.addf %19, %21 : vector<8x128xf32>
    %23 = arith.truncf %22 : vector<8x128xf32> to vector<8x128xbf16>
    %c0_17 = arith.constant 0 : index
    %c0_18 = arith.constant 0 : index
    %24 = vector.load %arg8[%c0_17, %c0_18] : memref<8x128xbf16, #tpu.memory_space<vmem>>, vector<8x128xbf16>
    tpu.vector_store %arg8[%c0_17, %c0_18], %23 {strides = array<i32>} : memref<8x128xbf16, #tpu.memory_space<vmem>>, vector<8x128xbf16>,
    return
  }
  func.func @transform_0(%arg0: i32) -> (i32, i32) {
    %c0_i32 = arith.constant 0 : i32
    %c0_i32_0 = arith.constant 0 : i32
    return %arg0, %c0_i32 : i32, i32
  }
  func.func @transform_1(%arg0: i32) -> (i32, i32) {
    %c0_i32 = arith.constant 0 : i32
    %c0_i32_0 = arith.constant 0 : i32
    %c0_i32_1 = arith.constant 0 : i32
    return %c0_i32, %c0_i32_0 : i32, i32
  }
  func.func @transform_2(%arg0: i32) -> (i32, i32) {
    %c0_i32 = arith.constant 0 : i32
    %c0_i32_0 = arith.constant 0 : i32
    %c0_i32_1 = arith.constant 0 : i32
    return %c0_i32, %c0_i32_0 : i32, i32
  }
  func.func @transform_3(%arg0: i32) -> (i32, i32) {
    %c0_i32 = arith.constant 0 : i32
    %c0_i32_0 = arith.constant 0 : i32
    %c0_i32_1 = arith.constant 0 : i32
    return %c0_i32, %c0_i32_0 : i32, i32
  }
  func.func @transform_4(%arg0: i32) -> (i32, i32) {
    %c0_i32 = arith.constant 0 : i32
    %c0_i32_0 = arith.constant 0 : i32
    %c0_i32_1 = arith.constant 0 : i32
    return %c0_i32, %c0_i32_0 : i32, i32
  }
  func.func @transform_5(%arg0: i32) -> (i32, i32) {
    %c0_i32 = arith.constant 0 : i32
    %c0_i32_0 = arith.constant 0 : i32
    %c0_i32_1 = arith.constant 0 : i32
    return %c0_i32, %c0_i32_0 : i32, i32
  }
  func.func @transform_6(%arg0: i32) -> (i32, i32) {
    %c0_i32 = arith.constant 0 : i32
    %c0_i32_0 = arith.constant 0 : i32
    %c0_i32_1 = arith.constant 0 : i32
    return %c0_i32, %c0_i32_0 : i32, i32
  }
  func.func @transform_7(%arg0: i32) -> (i32, i32) {
    %c0_i32 = arith.constant 0 : i32
    %c0_i32_0 = arith.constant 0 : i32
    return %arg0, %c0_i32 : i32, i32
  }
}

</mosaic_0001>

<llo_original>
// kernel: tpu_custom_call.1
$region0: #{tpu_custom_call.1}
  #allocation0 [shape = 'u32[]', space=smem, size = 0x4, offset = 0x4, fixed_abs, tag = 'smem constant byte address 0x4 - core index']
  #allocation1 [shape = 'u32[144,128]{1,0:T(1,128)}', space=vmem, size = 0x12000, scoped, tag = 'internal scratch']
  %s0 = inlined_call_operand.hbm [shape: f32[8,768], index: 0, kind: input, shape index: {}]
  %s1 = inlined_call_operand.hbm [shape: bf16[768,128], index: 1, kind: input, shape index: {}]
  %s2 = inlined_call_operand.vmem [shape: f32[1,128], index: 2, kind: input, shape index: {}]
  %s3 = inlined_call_operand.hbm [shape: bf16[128,128], index: 3, kind: input, shape index: {}]
  %s4 = inlined_call_operand.vmem [shape: f32[1,128], index: 4, kind: input, shape index: {}]
  %s5 = inlined_call_operand.hbm [shape: bf16[128,128], index: 5, kind: input, shape index: {}]
  %s6 = inlined_call_operand.vmem [shape: f32[1,128], index: 6, kind: input, shape index: {}]
  %s7 = inlined_call_operand.hbm [shape: bf16[8,128], index: 7, kind: output, shape index: {}]
  %s8 = sld [smem:[#allocation0]]
  $region54: #{tpu_custom_call.1} parent=0
    _
  %s10 = ssub.s32 1, %s8
  %s11 = scalar_select 0, %s10, %s8
  $region1: #{tpu_custom_call.1} parent=0
    #allocation2 [shape = 'u8[24576]{0}', space=vmem, size = 0x6000, scoped, tag = 'input window, operand 0, single buffered']
    #allocation3 [shape = 's32[1]{0}', space=sflag, size = 0x4, scoped, tag = 'scoped memory for tpu_custom_call.1']
    #allocation4 [shape = 's32[1]{0}', space=sflag, size = 0x4, scoped, tag = 'scoped memory for tpu_custom_call.1']
    #allocation5 [shape = 'u8[196608]{0}', space=vmem, size = 0x30000, scoped, tag = 'input window, operand 1, single buffered']
    #allocation6 [shape = 's32[1]{0}', space=sflag, size = 0x4, scoped, tag = 'scoped memory for tpu_custom_call.1']
    #allocation7 [shape = 'u8[32768]{0}', space=vmem, size = 0x8000, scoped, tag = 'input window, operand 3, single buffered']
    #allocation8 [shape = 'u8[32768]{0}', space=vmem, size = 0x8000, scoped, tag = 'input window, operand 5, single buffered']
    #allocation9 [shape = 's32[1]{0}', space=sflag, size = 0x4, scoped, tag = 'scoped memory for tpu_custom_call.1']
    #allocation10 [shape = 'u8[2048]{0}', space=vmem, size = 0x800, scoped, tag = 'output window, operand 0, single buffered']
    %12 = vsyncpa [#allocation3], 0
    %13 = vsyncpa [#allocation6], 0
    %14 = vsyncpa [#allocation9], 0
    %15 = vsyncpa [#allocation4], 0
    // Predicated region
    $region2: #{tpu_custom_call.1} parent=1 // pred_check
      _
    $region3: #{tpu_custom_call.1} parent=1 // pred_check_branch
      %17 = sbr.rel (0) target = $region5
    $region4: #{tpu_custom_call.1} parent=1 // pred_region
      %s19 = ssub.s32 768, 768
      %20 = vsyncadd [#allocation3], %s19
      %s22 = sshll.u32 [#allocation2], 4
      %s23 = int_to_ptr.vmem [resolvable:$true] %s22
      %25 = dma.hbm_to_vmem [thread:$0]  %s0, 768, %s23, [#allocation3]
    $region5: #{tpu_custom_call.1} parent=1 // pred_fallthru
      _
    // Predicated region
    $region6: #{tpu_custom_call.1} parent=1 // pred_check
      _
    $region7: #{tpu_custom_call.1} parent=1 // pred_check_branch
      %27 = sbr.rel (0) target = $region9
    $region8: #{tpu_custom_call.1} parent=1 // pred_region
      %s29 = ssub.s32 6144, 6144
      %30 = vsyncadd [#allocation6], %s29
      %s31 = sshll.u32 [#allocation5], 4
      %s32 = int_to_ptr.vmem [resolvable:$true] %s31
      %37 = dma.hbm_to_vmem [thread:$0]  %s1, 6144, %s32, [#allocation6], 64, 64, 4
    $region9: #{tpu_custom_call.1} parent=1 // pred_fallthru
      _
    // Predicated region
    $region10: #{tpu_custom_call.1} parent=1 // pred_check
      _
    $region11: #{tpu_custom_call.1} parent=1 // pred_check_branch
      %39 = sbr.rel (0) target = $region13
    $region12: #{tpu_custom_call.1} parent=1 // pred_region
      _
    $region13: #{tpu_custom_call.1} parent=1 // pred_fallthru
      _
    // Predicated region
    $region14: #{tpu_custom_call.1} parent=1 // pred_check
      _
    $region15: #{tpu_custom_call.1} parent=1 // pred_check_branch
      %41 = sbr.rel (0) target = $region17
    $region16: #{tpu_custom_call.1} parent=1 // pred_region
      %s43 = ssub.s32 1024, 1024
      %44 = vsyncadd [#allocation6], %s43
      %s45 = sshll.u32 [#allocation7], 4
      %s46 = int_to_ptr.vmem [resolvable:$true] %s45
      %51 = dma.hbm_to_vmem [thread:$0]  %s3, 1024, %s46, [#allocation6], 64, 64, 4
    $region17: #{tpu_custom_call.1} parent=1 // pred_fallthru
      _
    // Predicated region
    $region18: #{tpu_custom_call.1} parent=1 // pred_check
      _
    $region19: #{tpu_custom_call.1} parent=1 // pred_check_branch
      %53 = sbr.rel (0) target = $region21
    $region20: #{tpu_custom_call.1} parent=1 // pred_region
      _
    $region21: #{tpu_custom_call.1} parent=1 // pred_fallthru
      _
    // Predicated region
    $region22: #{tpu_custom_call.1} parent=1 // pred_check
      _
    $region23: #{tpu_custom_call.1} parent=1 // pred_check_branch
      %55 = sbr.rel (0) target = $region25
    $region24: #{tpu_custom_call.1} parent=1 // pred_region
      %s57 = ssub.s32 1024, 1024
      %58 = vsyncadd [#allocation9], %s57
      %s59 = sshll.u32 [#allocation8], 4
      %s60 = int_to_ptr.vmem [resolvable:$true] %s59
      %65 = dma.hbm_to_vmem [thread:$0]  %s5, 1024, %s60, [#allocation9], 64, 64, 4
    $region25: #{tpu_custom_call.1} parent=1 // pred_fallthru
      _
    // Predicated region
    $region26: #{tpu_custom_call.1} parent=1 // pred_check
      _
    $region27: #{tpu_custom_call.1} parent=1 // pred_check_branch
      %67 = sbr.rel (0) target = $region29
    $region28: #{tpu_custom_call.1} parent=1 // pred_region
      _
    $region29: #{tpu_custom_call.1} parent=1 // pred_fallthru
      _
    // Predicated region
    $region30: #{tpu_custom_call.1} parent=1 // pred_check
      _
    $region31: #{tpu_custom_call.1} parent=1 // pred_check_branch
      %69 = sbr.rel (0) target = $region33
    $region32: #{tpu_custom_call.1} parent=1 // pred_region
      %70 = dma.done [#allocation3], 768
    $region33: #{tpu_custom_call.1} parent=1 // pred_fallthru
      _
    // Predicated region
    $region34: #{tpu_custom_call.1} parent=1 // pred_check
      _
    $region35: #{tpu_custom_call.1} parent=1 // pred_check_branch
      %72 = sbr.rel (0) target = $region37
    $region36: #{tpu_custom_call.1} parent=1 // pred_region
      %73 = dma.done [#allocation6], 6144
    $region37: #{tpu_custom_call.1} parent=1 // pred_fallthru
      _
    // Predicated region
    $region38: #{tpu_custom_call.1} parent=1 // pred_check
      _
    $region39: #{tpu_custom_call.1} parent=1 // pred_check_branch
      %75 = sbr.rel (0) target = $region41
    $region40: #{tpu_custom_call.1} parent=1 // pred_region
      %76 = dma.done [#allocation6], 1024
    $region41: #{tpu_custom_call.1} parent=1 // pred_fallthru
      _
    // Predicated region
    $region42: #{tpu_custom_call.1} parent=1 // pred_check
      _
    $region43: #{tpu_custom_call.1} parent=1 // pred_check_branch
      %78 = sbr.rel (0) target = $region45
    $region44: #{tpu_custom_call.1} parent=1 // pred_region
      %79 = dma.done [#allocation9], 1024
    $region45: #{tpu_custom_call.1} parent=1 // pred_fallthru
      _
    %v81 = vld [vmem:[#allocation2] sm:$0xff]
    %v82 = vld [vmem:[#allocation2 + $0x8] sm:$0xff]
    %v83 = vld [vmem:[#allocation2 + $0x10] sm:$0xff]
    %v84 = vld [vmem:[#allocation2 + $0x18] sm:$0xff]
    %v85 = vld [vmem:[#allocation2 + $0x20] sm:$0xff]
    %v86 = vld [vmem:[#allocation2 + $0x28] sm:$0xff]
    %v87 = vpack.c.bf16 %v81, %v81
    %v88 = vpack.c.bf16 %v82, %v82
    %v89 = vpack.c.bf16 %v83, %v83
    %v90 = vpack.c.bf16 %v84, %v84
    %v91 = vpack.c.bf16 %v85, %v85
    %v92 = vpack.c.bf16 %v86, %v86
    %v93 = vld [vmem:[#allocation5] sm:$0xf]
    %v94 = vld [vmem:[#allocation5 + $0x4] sm:$0xf]
    %v95 = vld [vmem:[#allocation5 + $0x8] sm:$0xf]
    %v96 = vld [vmem:[#allocation5 + $0xc] sm:$0xf]
    %v97 = vld [vmem:[#allocation5 + $0x10] sm:$0xf]
    %v98 = vld [vmem:[#allocation5 + $0x14] sm:$0xf]
    %v99 = vld [vmem:[#allocation5 + $0x18] sm:$0xf]
    %v100 = vld [vmem:[#allocation5 + $0x1c] sm:$0xf]
    %v101 = vld [vmem:[#allocation5 + $0x20] sm:$0xf]
    %v102 = vld [vmem:[#allocation5 + $0x24] sm:$0xf]
    %v103 = vld [vmem:[#allocation5 + $0x28] sm:$0xf]
    %v104 = vld [vmem:[#allocation5 + $0x2c] sm:$0xf]
    %v105 = vld [vmem:[#allocation5 + $0x30] sm:$0xf]
    %v106 = vld [vmem:[#allocation5 + $0x34] sm:$0xf]
    %v107 = vld [vmem:[#allocation5 + $0x38] sm:$0xf]
    %v108 = vld [vmem:[#allocation5 + $0x3c] sm:$0xf]
    %v109 = vld [vmem:[#allocation5 + $0x40] sm:$0xf]
    %v110 = vld [vmem:[#allocation5 + $0x44] sm:$0xf]
    %v111 = vld [vmem:[#allocation5 + $0x48] sm:$0xf]
    %v112 = vld [vmem:[#allocation5 + $0x4c] sm:$0xf]
    %v113 = vld [vmem:[#allocation5 + $0x50] sm:$0xf]
    %v114 = vld [vmem:[#allocation5 + $0x54] sm:$0xf]
    %v115 = vld [vmem:[#allocation5 + $0x58] sm:$0xf]
    %v116 = vld [vmem:[#allocation5 + $0x5c] sm:$0xf]
    %v117 = vld [vmem:[#allocation5 + $0x60] sm:$0xf]
    %v118 = vld [vmem:[#allocation5 + $0x64] sm:$0xf]
    %v119 = vld [vmem:[#allocation5 + $0x68] sm:$0xf]
    %v120 = vld [vmem:[#allocation5 + $0x6c] sm:$0xf]
    %v121 = vld [vmem:[#allocation5 + $0x70] sm:$0xf]
    %v122 = vld [vmem:[#allocation5 + $0x74] sm:$0xf]
    %v123 = vld [vmem:[#allocation5 + $0x78] sm:$0xf]
    %v124 = vld [vmem:[#allocation5 + $0x7c] sm:$0xf]
    %v125 = vld [vmem:[#allocation5 + $0x80] sm:$0xf]
    %v126 = vld [vmem:[#allocation5 + $0x84] sm:$0xf]
    %v127 = vld [vmem:[#allocation5 + $0x88] sm:$0xf]
    %v128 = vld [vmem:[#allocation5 + $0x8c] sm:$0xf]
    %v129 = vld [vmem:[#allocation5 + $0x90] sm:$0xf]
    %v130 = vld [vmem:[#allocation5 + $0x94] sm:$0xf]
    %v131 = vld [vmem:[#allocation5 + $0x98] sm:$0xf]
    %v132 = vld [vmem:[#allocation5 + $0x9c] sm:$0xf]
    %v133 = vld [vmem:[#allocation5 + $0xa0] sm:$0xf]
    %v134 = vld [vmem:[#allocation5 + $0xa4] sm:$0xf]
    %v135 = vld [vmem:[#allocation5 + $0xa8] sm:$0xf]
    %v136 = vld [vmem:[#allocation5 + $0xac] sm:$0xf]
    %v137 = vld [vmem:[#allocation5 + $0xb0] sm:$0xf]
    %v138 = vld [vmem:[#allocation5 + $0xb4] sm:$0xf]
    %v139 = vld [vmem:[#allocation5 + $0xb8] sm:$0xf]
    %v140 = vld [vmem:[#allocation5 + $0xbc] sm:$0xf]
    %v141 = vld [vmem:[#allocation5 + $0xc0] sm:$0xf]
    %v142 = vld [vmem:[#allocation5 + $0xc4] sm:$0xf]
    %v143 = vld [vmem:[#allocation5 + $0xc8] sm:$0xf]
    %v144 = vld [vmem:[#allocation5 + $0xcc] sm:$0xf]
    %v145 = vld [vmem:[#allocation5 + $0xd0] sm:$0xf]
    %v146 = vld [vmem:[#allocation5 + $0xd4] sm:$0xf]
    %v147 = vld [vmem:[#allocation5 + $0xd8] sm:$0xf]
    %v148 = vld [vmem:[#allocation5 + $0xdc] sm:$0xf]
    %v149 = vld [vmem:[#allocation5 + $0xe0] sm:$0xf]
    %v150 = vld [vmem:[#allocation5 + $0xe4] sm:$0xf]
    %v151 = vld [vmem:[#allocation5 + $0xe8] sm:$0xf]
    %v152 = vld [vmem:[#allocation5 + $0xec] sm:$0xf]
    %v153 = vld [vmem:[#allocation5 + $0xf0] sm:$0xf]
    %v154 = vld [vmem:[#allocation5 + $0xf4] sm:$0xf]
    %v155 = vld [vmem:[#allocation5 + $0xf8] sm:$0xf]
    %v156 = vld [vmem:[#allocation5 + $0xfc] sm:$0xf]
    %v157 = vld [vmem:[#allocation5 + $0x100] sm:$0xf]
    %v158 = vld [vmem:[#allocation5 + $0x104] sm:$0xf]
    %v159 = vld [vmem:[#allocation5 + $0x108] sm:$0xf]
    %v160 = vld [vmem:[#allocation5 + $0x10c] sm:$0xf]
    %v161 = vld [vmem:[#allocation5 + $0x110] sm:$0xf]
    %v162 = vld [vmem:[#allocation5 + $0x114] sm:$0xf]
    %v163 = vld [vmem:[#allocation5 + $0x118] sm:$0xf]
    %v164 = vld [vmem:[#allocation5 + $0x11c] sm:$0xf]
    %v165 = vld [vmem:[#allocation5 + $0x120] sm:$0xf]
    %v166 = vld [vmem:[#allocation5 + $0x124] sm:$0xf]
    %v167 = vld [vmem:[#allocation5 + $0x128] sm:$0xf]
    %v168 = vld [vmem:[#allocation5 + $0x12c] sm:$0xf]
    %v169 = vld [vmem:[#allocation5 + $0x130] sm:$0xf]
    %v170 = vld [vmem:[#allocation5 + $0x134] sm:$0xf]
    %v171 = vld [vmem:[#allocation5 + $0x138] sm:$0xf]
    %v172 = vld [vmem:[#allocation5 + $0x13c] sm:$0xf]
    %v173 = vld [vmem:[#allocation5 + $0x140] sm:$0xf]
    %v174 = vld [vmem:[#allocation5 + $0x144] sm:$0xf]
    %v175 = vld [vmem:[#allocation5 + $0x148] sm:$0xf]
    %v176 = vld [vmem:[#allocation5 + $0x14c] sm:$0xf]
    %v177 = vld [vmem:[#allocation5 + $0x150] sm:$0xf]
    %v178 = vld [vmem:[#allocation5 + $0x154] sm:$0xf]
    %v179 = vld [vmem:[#allocation5 + $0x158] sm:$0xf]
    %v180 = vld [vmem:[#allocation5 + $0x15c] sm:$0xf]
    %v181 = vld [vmem:[#allocation5 + $0x160] sm:$0xf]
    %v182 = vld [vmem:[#allocation5 + $0x164] sm:$0xf]
    %v183 = vld [vmem:[#allocation5 + $0x168] sm:$0xf]
    %v184 = vld [vmem:[#allocation5 + $0x16c] sm:$0xf]
    %v185 = vld [vmem:[#allocation5 + $0x170] sm:$0xf]
    %v186 = vld [vmem:[#allocation5 + $0x174] sm:$0xf]
    %v187 = vld [vmem:[#allocation5 + $0x178] sm:$0xf]
    %v188 = vld [vmem:[#allocation5 + $0x17c] sm:$0xf]
    %v189 = vld [vmem:[%s2] sm:$0x1]
    %v191 = vlaneseq
    %v192 = vshrl.u32 %v191, 7
    %v193 = vsub.s32 0, %v192
    %v194 = vrot.slane %v189, %v193
    %v292 = vunpack.c.l.b16 %v93
    %v293 = vunpack.c.l.b16 %v94
    %v294 = vunpack.c.l.b16 %v95
    %v295 = vunpack.c.l.b16 %v96
    %v296 = vunpack.c.l.b16 %v97
    %v297 = vunpack.c.l.b16 %v98
    %v298 = vunpack.c.l.b16 %v99
    %v299 = vunpack.c.l.b16 %v100
    %v300 = vunpack.c.l.b16 %v101
    %v301 = vunpack.c.l.b16 %v102
    %v302 = vunpack.c.l.b16 %v103
    %v303 = vunpack.c.l.b16 %v104
    %v304 = vunpack.c.l.b16 %v105
    %v305 = vunpack.c.l.b16 %v106
    %v306 = vunpack.c.l.b16 %v107
    %v307 = vunpack.c.l.b16 %v108
    %v308 = vunpack.c.l.b16 %v109
    %v309 = vunpack.c.l.b16 %v110
    %v310 = vunpack.c.l.b16 %v111
    %v311 = vunpack.c.l.b16 %v112
    %v312 = vunpack.c.l.b16 %v113
    %v313 = vunpack.c.l.b16 %v114
    %v314 = vunpack.c.l.b16 %v115
    %v315 = vunpack.c.l.b16 %v116
    %v316 = vunpack.c.l.b16 %v117
    %v317 = vunpack.c.l.b16 %v118
    %v318 = vunpack.c.l.b16 %v119
    %v319 = vunpack.c.l.b16 %v120
    %v320 = vunpack.c.l.b16 %v121
    %v321 = vunpack.c.l.b16 %v122
    %v322 = vunpack.c.l.b16 %v123
    %v323 = vunpack.c.l.b16 %v124
    %v324 = vunpack.c.l.b16 %v125
    %v325 = vunpack.c.l.b16 %v126
    %v326 = vunpack.c.l.b16 %v127
    %v327 = vunpack.c.l.b16 %v128
    %v328 = vunpack.c.l.b16 %v129
    %v329 = vunpack.c.l.b16 %v130
    %v330 = vunpack.c.l.b16 %v131
    %v331 = vunpack.c.l.b16 %v132
    %v332 = vunpack.c.l.b16 %v133
    %v333 = vunpack.c.l.b16 %v134
    %v334 = vunpack.c.l.b16 %v135
    %v335 = vunpack.c.l.b16 %v136
    %v336 = vunpack.c.l.b16 %v137
    %v337 = vunpack.c.l.b16 %v138
    %v338 = vunpack.c.l.b16 %v139
    %v339 = vunpack.c.l.b16 %v140
    %v340 = vunpack.c.l.b16 %v141
    %v341 = vunpack.c.l.b16 %v142
    %v342 = vunpack.c.l.b16 %v143
    %v343 = vunpack.c.l.b16 %v144
    %v344 = vunpack.c.l.b16 %v145
    %v345 = vunpack.c.l.b16 %v146
    %v346 = vunpack.c.l.b16 %v147
    %v347 = vunpack.c.l.b16 %v148
    %v348 = vunpack.c.l.b16 %v149
    %v349 = vunpack.c.l.b16 %v150
    %v350 = vunpack.c.l.b16 %v151
    %v351 = vunpack.c.l.b16 %v152
    %v352 = vunpack.c.l.b16 %v153
    %v353 = vunpack.c.l.b16 %v154
    %v354 = vunpack.c.l.b16 %v155
    %v355 = vunpack.c.l.b16 %v156
    %v356 = vunpack.c.l.b16 %v157
    %v357 = vunpack.c.l.b16 %v158
    %v358 = vunpack.c.l.b16 %v159
    %v359 = vunpack.c.l.b16 %v160
    %v360 = vunpack.c.l.b16 %v161
    %v361 = vunpack.c.l.b16 %v162
    %v362 = vunpack.c.l.b16 %v163
    %v363 = vunpack.c.l.b16 %v164
    %v364 = vunpack.c.l.b16 %v165
    %v365 = vunpack.c.l.b16 %v166
    %v366 = vunpack.c.l.b16 %v167
    %v367 = vunpack.c.l.b16 %v168
    %v368 = vunpack.c.l.b16 %v169
    %v369 = vunpack.c.l.b16 %v170
    %v370 = vunpack.c.l.b16 %v171
    %v371 = vunpack.c.l.b16 %v172
    %v372 = vunpack.c.l.b16 %v173
    %v373 = vunpack.c.l.b16 %v174
    %v374 = vunpack.c.l.b16 %v175
    %v375 = vunpack.c.l.b16 %v176
    %v376 = vunpack.c.l.b16 %v177
    %v377 = vunpack.c.l.b16 %v178
    %v378 = vunpack.c.l.b16 %v179
    %v379 = vunpack.c.l.b16 %v180
    %v380 = vunpack.c.l.b16 %v181
    %v381 = vunpack.c.l.b16 %v182
    %v382 = vunpack.c.l.b16 %v183
    %v383 = vunpack.c.l.b16 %v184
    %v384 = vunpack.c.l.b16 %v185
    %v385 = vunpack.c.l.b16 %v186
    %v386 = vunpack.c.l.b16 %v187
    %v387 = vunpack.c.l.b16 %v188
    %v388 = vpack.c.b16 %v293, %v292
    %v389 = vpack.c.b16 %v295, %v294
    %v390 = vpack.c.b16 %v297, %v296
    %v391 = vpack.c.b16 %v299, %v298
    %v392 = vpack.c.b16 %v301, %v300
    %v393 = vpack.c.b16 %v303, %v302
    %v394 = vpack.c.b16 %v305, %v304
    %v395 = vpack.c.b16 %v307, %v306
    %v396 = vpack.c.b16 %v309, %v308
    %v397 = vpack.c.b16 %v311, %v310
    %v398 = vpack.c.b16 %v313, %v312
    %v399 = vpack.c.b16 %v315, %v314
    %v400 = vpack.c.b16 %v317, %v316
    %v401 = vpack.c.b16 %v319, %v318
    %v402 = vpack.c.b16 %v321, %v320
    %v403 = vpack.c.b16 %v323, %v322
    %v404 = vpack.c.b16 %v325, %v324
    %v405 = vpack.c.b16 %v327, %v326
    %v406 = vpack.c.b16 %v329, %v328
    %v407 = vpack.c.b16 %v331, %v330
    %v408 = vpack.c.b16 %v333, %v332
    %v409 = vpack.c.b16 %v335, %v334
    %v410 = vpack.c.b16 %v337, %v336
    %v411 = vpack.c.b16 %v339, %v338
    %v412 = vpack.c.b16 %v341, %v340
    %v413 = vpack.c.b16 %v343, %v342
    %v414 = vpack.c.b16 %v345, %v344
    %v415 = vpack.c.b16 %v347, %v346
    %v416 = vpack.c.b16 %v349, %v348
    %v417 = vpack.c.b16 %v351, %v350
    %v418 = vpack.c.b16 %v353, %v352
    %v419 = vpack.c.b16 %v355, %v354
    %v420 = vpack.c.b16 %v357, %v356
    %v421 = vpack.c.b16 %v359, %v358
    %v422 = vpack.c.b16 %v361, %v360
    %v423 = vpack.c.b16 %v363, %v362
    %v424 = vpack.c.b16 %v365, %v364
    %v425 = vpack.c.b16 %v367, %v366
    %v426 = vpack.c.b16 %v369, %v368
    %v427 = vpack.c.b16 %v371, %v370
    %v428 = vpack.c.b16 %v373, %v372
    %v429 = vpack.c.b16 %v375, %v374
    %v430 = vpack.c.b16 %v377, %v376
    %v431 = vpack.c.b16 %v379, %v378
    %v432 = vpack.c.b16 %v381, %v380
    %v433 = vpack.c.b16 %v383, %v382
    %v434 = vpack.c.b16 %v385, %v384
    %v435 = vpack.c.b16 %v387, %v386
    %484 = vmatprep.subr.bf16.mxu0 0
    %485 = vmatpush1.bf16.msra.mxu0 %v388
    %486 = vmatprep.subr.bf16.mxu0 0
    %487 = vmatpush1.bf16.msra.mxu0 %v389
    %488 = vmatprep.subr.bf16.mxu0 0
    %489 = vmatpush1.bf16.msra.mxu0 %v390
    %490 = vmatprep.subr.bf16.mxu0 0
    %491 = vmatpush1.bf16.msra.mxu0 %v391
    %492 = vmatprep.subr.bf16.mxu0 0
    %493 = vmatpush1.bf16.msra.mxu0 %v392
    %494 = vmatprep.subr.bf16.mxu0 0
    %495 = vmatpush1.bf16.msra.mxu0 %v393
    %496 = vmatprep.subr.bf16.mxu0 0
    %497 = vmatpush1.bf16.msra.mxu0 %v394
    %498 = vmatprep.subr.bf16.mxu0 0
    %499 = vmatpush1.bf16.msra.mxu0 %v395
    %500 = vmatprep.subr.bf16.mxu0 0
    %501 = vmatpush1.bf16.msra.mxu0 %v396
    %502 = vmatprep.subr.bf16.mxu0 0
    %503 = vmatpush1.bf16.msra.mxu0 %v397
    %504 = vmatprep.subr.bf16.mxu0 0
    %505 = vmatpush1.bf16.msra.mxu0 %v398
    %506 = vmatprep.subr.bf16.mxu0 0
    %507 = vmatpush1.bf16.msra.mxu0 %v399
    %508 = vmatprep.subr.bf16.mxu0 0
    %509 = vmatpush1.bf16.msra.mxu0 %v400
    %510 = vmatprep.subr.bf16.mxu0 0
    %511 = vmatpush1.bf16.msra.mxu0 %v401
    %512 = vmatprep.subr.bf16.mxu0 0
    %513 = vmatpush1.bf16.msra.mxu0 %v402
    %514 = vmatprep.subr.bf16.mxu0 0
    %515 = vmatpush1.bf16.msra.mxu0 %v403
    %516 = vmatprep.mubr.bf16.mxu0 %v88
    %517 = vmatmul.mubr.bf16.gmra.mrb[0].mxu0 %v87
    %v518 = vpop.f32.mrb[0].mxu0
    %v519 = vadd.f32 %v194, %v518
    %v520 = vpop.f32.mrb[0].mxu0
    %v521 = vpop.f32.mrb[0].mxu0
    %v522 = vpop.f32.mrb[0].mxu0
    %523 = vdwg.mxu0
    %524 = vmatprep.subr.bf16.mxu0 0
    %525 = vmatpush1.bf16.msra.mxu0 %v404
    %526 = vmatprep.subr.bf16.mxu0 0
    %527 = vmatpush1.bf16.msra.mxu0 %v405
    %528 = vmatprep.subr.bf16.mxu0 0
    %529 = vmatpush1.bf16.msra.mxu0 %v406
    %530 = vmatprep.subr.bf16.mxu0 0
    %531 = vmatpush1.bf16.msra.mxu0 %v407
    %532 = vmatprep.subr.bf16.mxu0 0
    %533 = vmatpush1.bf16.msra.mxu0 %v408
    %534 = vmatprep.subr.bf16.mxu0 0
    %535 = vmatpush1.bf16.msra.mxu0 %v409
    %536 = vmatprep.subr.bf16.mxu0 0
    %537 = vmatpush1.bf16.msra.mxu0 %v410
    %538 = vmatprep.subr.bf16.mxu0 0
    %539 = vmatpush1.bf16.msra.mxu0 %v411
    %540 = vmatprep.subr.bf16.mxu0 0
    %541 = vmatpush1.bf16.msra.mxu0 %v412
    %542 = vmatprep.subr.bf16.mxu0 0
    %543 = vmatpush1.bf16.msra.mxu0 %v413
    %544 = vmatprep.subr.bf16.mxu0 0
    %545 = vmatpush1.bf16.msra.mxu0 %v414
    %546 = vmatprep.subr.bf16.mxu0 0
    %547 = vmatpush1.bf16.msra.mxu0 %v415
    %548 = vmatprep.subr.bf16.mxu0 0
    %549 = vmatpush1.bf16.msra.mxu0 %v416
    %550 = vmatprep.subr.bf16.mxu0 0
    %551 = vmatpush1.bf16.msra.mxu0 %v417
    %552 = vmatprep.subr.bf16.mxu0 0
    %553 = vmatpush1.bf16.msra.mxu0 %v418
    %554 = vmatprep.subr.bf16.mxu0 0
    %555 = vmatpush1.bf16.msra.mxu0 %v419
    %556 = vmatprep.mubr.bf16.mxu0 %v90
    %557 = vmatmul.mubr.bf16.gmra.mrb[0].mxu0 %v89
    %v558 = vpop.f32.mrb[0].mxu0
    %v559 = vadd.f32 %v519, %v558
    %v560 = vpop.f32.mrb[0].mxu0
    %v561 = vpop.f32.mrb[0].mxu0
    %v562 = vpop.f32.mrb[0].mxu0
    %563 = vdwg.mxu0
    %564 = vmatprep.subr.bf16.mxu0 0
    %565 = vmatpush1.bf16.msra.mxu0 %v420
    %566 = vmatprep.subr.bf16.mxu0 0
    %567 = vmatpush1.bf16.msra.mxu0 %v421
    %568 = vmatprep.subr.bf16.mxu0 0
    %569 = vmatpush1.bf16.msra.mxu0 %v422
    %570 = vmatprep.subr.bf16.mxu0 0
    %571 = vmatpush1.bf16.msra.mxu0 %v423
    %572 = vmatprep.subr.bf16.mxu0 0
    %573 = vmatpush1.bf16.msra.mxu0 %v424
    %574 = vmatprep.subr.bf16.mxu0 0
    %575 = vmatpush1.bf16.msra.mxu0 %v425
    %576 = vmatprep.subr.bf16.mxu0 0
    %577 = vmatpush1.bf16.msra.mxu0 %v426
    %578 = vmatprep.subr.bf16.mxu0 0
    %579 = vmatpush1.bf16.msra.mxu0 %v427
    %580 = vmatprep.subr.bf16.mxu0 0
    %581 = vmatpush1.bf16.msra.mxu0 %v428
    %582 = vmatprep.subr.bf16.mxu0 0
    %583 = vmatpush1.bf16.msra.mxu0 %v429
    %584 = vmatprep.subr.bf16.mxu0 0
    %585 = vmatpush1.bf16.msra.mxu0 %v430
    %586 = vmatprep.subr.bf16.mxu0 0
    %587 = vmatpush1.bf16.msra.mxu0 %v431
    %588 = vmatprep.subr.bf16.mxu0 0
    %589 = vmatpush1.bf16.msra.mxu0 %v432
    %590 = vmatprep.subr.bf16.mxu0 0
    %591 = vmatpush1.bf16.msra.mxu0 %v433
    %592 = vmatprep.subr.bf16.mxu0 0
    %593 = vmatpush1.bf16.msra.mxu0 %v434
    %594 = vmatprep.subr.bf16.mxu0 0
    %595 = vmatpush1.bf16.msra.mxu0 %v435
    %596 = vmatprep.mubr.bf16.mxu0 %v92
    %597 = vmatmul.mubr.bf16.gmra.mrb[0].mxu0 %v91
    %v598 = vpop.f32.mrb[0].mxu0
    %v599 = vadd.f32 %v559, %v598
    %v600 = vpop.f32.mrb[0].mxu0
    %v601 = vpop.f32.mrb[0].mxu0
    %v602 = vpop.f32.mrb[0].mxu0
    %603 = vdwg.mxu0
    %v604 = vmax.f32 %v599, 0.0
    %v605 = vpack.c.bf16 %v604, %v604
    %v606 = vld [vmem:[#allocation7] sm:$0xf]
    %v607 = vld [vmem:[#allocation7 + $0x4] sm:$0xf]
    %v608 = vld [vmem:[#allocation7 + $0x8] sm:$0xf]
    %v609 = vld [vmem:[#allocation7 + $0xc] sm:$0xf]
    %v610 = vld [vmem:[#allocation7 + $0x10] sm:$0xf]
    %v611 = vld [vmem:[#allocation7 + $0x14] sm:$0xf]
    %v612 = vld [vmem:[#allocation7 + $0x18] sm:$0xf]
    %v613 = vld [vmem:[#allocation7 + $0x1c] sm:$0xf]
    %v614 = vld [vmem:[#allocation7 + $0x20] sm:$0xf]
    %v615 = vld [vmem:[#allocation7 + $0x24] sm:$0xf]
    %v616 = vld [vmem:[#allocation7 + $0x28] sm:$0xf]
    %v617 = vld [vmem:[#allocation7 + $0x2c] sm:$0xf]
    %v618 = vld [vmem:[#allocation7 + $0x30] sm:$0xf]
    %v619 = vld [vmem:[#allocation7 + $0x34] sm:$0xf]
    %v620 = vld [vmem:[#allocation7 + $0x38] sm:$0xf]
    %v621 = vld [vmem:[#allocation7 + $0x3c] sm:$0xf]
    %v622 = vld [vmem:[%s4] sm:$0x1]
    %v624 = vlaneseq
    %v625 = vshrl.u32 %v624, 7
    %v626 = vsub.s32 0, %v625
    %v627 = vrot.slane %v622, %v626
    %v645 = vunpack.c.l.b16 %v606
    %v646 = vunpack.c.l.b16 %v607
    %v647 = vunpack.c.l.b16 %v608
    %v648 = vunpack.c.l.b16 %v609
    %v649 = vunpack.c.l.b16 %v610
    %v650 = vunpack.c.l.b16 %v611
    %v651 = vunpack.c.l.b16 %v612
    %v652 = vunpack.c.l.b16 %v613
    %v653 = vunpack.c.l.b16 %v614
    %v654 = vunpack.c.l.b16 %v615
    %v655 = vunpack.c.l.b16 %v616
    %v656 = vunpack.c.l.b16 %v617
    %v657 = vunpack.c.l.b16 %v618
    %v658 = vunpack.c.l.b16 %v619
    %v659 = vunpack.c.l.b16 %v620
    %v660 = vunpack.c.l.b16 %v621
    %v661 = vpack.c.b16 %v646, %v645
    %v662 = vpack.c.b16 %v648, %v647
    %v663 = vpack.c.b16 %v650, %v649
    %v664 = vpack.c.b16 %v652, %v651
    %v665 = vpack.c.b16 %v654, %v653
    %v666 = vpack.c.b16 %v656, %v655
    %v667 = vpack.c.b16 %v658, %v657
    %v668 = vpack.c.b16 %v660, %v659
    %677 = vmatprep.subr.bf16.mxu0 0
    %678 = vmatpush1.bf16.msra.mxu0 %v661
    %679 = vmatprep.subr.bf16.mxu0 0
    %680 = vmatpush1.bf16.msra.mxu0 %v662
    %681 = vmatprep.subr.bf16.mxu0 0
    %682 = vmatpush1.bf16.msra.mxu0 %v663
    %683 = vmatprep.subr.bf16.mxu0 0
    %684 = vmatpush1.bf16.msra.mxu0 %v664
    %685 = vmatprep.subr.bf16.mxu0 0
    %686 = vmatpush1.bf16.msra.mxu0 %v665
    %687 = vmatprep.subr.bf16.mxu0 0
    %688 = vmatpush1.bf16.msra.mxu0 %v666
    %689 = vmatprep.subr.bf16.mxu0 0
    %690 = vmatpush1.bf16.msra.mxu0 %v667
    %691 = vmatprep.subr.bf16.mxu0 0
    %692 = vmatpush1.bf16.msra.mxu0 %v668
    %693 = vmatprep.subr.bf16.mxu0 0
    %694 = vmatpush1.bf16.msra.mxu0 0
    %695 = vmatprep.subr.bf16.mxu0 0
    %696 = vmatpush1.bf16.msra.mxu0 0
    %697 = vmatprep.subr.bf16.mxu0 0
    %698 = vmatpush1.bf16.msra.mxu0 0
    %699 = vmatprep.subr.bf16.mxu0 0
    %700 = vmatpush1.bf16.msra.mxu0 0
    %701 = vmatprep.subr.bf16.mxu0 0
    %702 = vmatpush1.bf16.msra.mxu0 0
    %703 = vmatprep.subr.bf16.mxu0 0
    %704 = vmatpush1.bf16.msra.mxu0 0
    %705 = vmatprep.subr.bf16.mxu0 0
    %706 = vmatpush1.bf16.msra.mxu0 0
    %707 = vmatprep.subr.bf16.mxu0 0
    %708 = vmatpush1.bf16.msra.mxu0 0
    %709 = vmatprep.mubr.bf16.mxu0 0
    %710 = vmatmul.mubr.bf16.gmra.mrb[0].mxu0 %v605
    %v711 = vpop.f32.mrb[0].mxu0
    %v712 = vadd.f32 %v627, %v711
    %v713 = vpop.f32.mrb[0].mxu0
    %v714 = vpop.f32.mrb[0].mxu0
    %v715 = vpop.f32.mrb[0].mxu0
    %716 = vdwg.mxu0
    %v717 = vmax.f32 %v712, 0.0
    %v718 = vpack.c.bf16 %v717, %v717
    %v719 = vld [vmem:[#allocation8] sm:$0xf]
    %v720 = vld [vmem:[#allocation8 + $0x4] sm:$0xf]
    %v721 = vld [vmem:[#allocation8 + $0x8] sm:$0xf]
    %v722 = vld [vmem:[#allocation8 + $0xc] sm:$0xf]
    %v723 = vld [vmem:[#allocation8 + $0x10] sm:$0xf]
    %v724 = vld [vmem:[#allocation8 + $0x14] sm:$0xf]
    %v725 = vld [vmem:[#allocation8 + $0x18] sm:$0xf]
    %v726 = vld [vmem:[#allocation8 + $0x1c] sm:$0xf]
    %v727 = vld [vmem:[#allocation8 + $0x20] sm:$0xf]
    %v728 = vld [vmem:[#allocation8 + $0x24] sm:$0xf]
    %v729 = vld [vmem:[#allocation8 + $0x28] sm:$0xf]
    %v730 = vld [vmem:[#allocation8 + $0x2c] sm:$0xf]
    %v731 = vld [vmem:[#allocation8 + $0x30] sm:$0xf]
    %v732 = vld [vmem:[#allocation8 + $0x34] sm:$0xf]
    %v733 = vld [vmem:[#allocation8 + $0x38] sm:$0xf]
    %v734 = vld [vmem:[#allocation8 + $0x3c] sm:$0xf]
    %v735 = vld [vmem:[%s6] sm:$0x1]
    %v737 = vlaneseq
    %v738 = vshrl.u32 %v737, 7
    %v739 = vsub.s32 0, %v738
    %v740 = vrot.slane %v735, %v739
    %v758 = vunpack.c.l.b16 %v719
    %v759 = vunpack.c.l.b16 %v720
    %v760 = vunpack.c.l.b16 %v721
    %v761 = vunpack.c.l.b16 %v722
    %v762 = vunpack.c.l.b16 %v723
    %v763 = vunpack.c.l.b16 %v724
    %v764 = vunpack.c.l.b16 %v725
    %v765 = vunpack.c.l.b16 %v726
    %v766 = vunpack.c.l.b16 %v727
    %v767 = vunpack.c.l.b16 %v728
    %v768 = vunpack.c.l.b16 %v729
    %v769 = vunpack.c.l.b16 %v730
    %v770 = vunpack.c.l.b16 %v731
    %v771 = vunpack.c.l.b16 %v732
    %v772 = vunpack.c.l.b16 %v733
    %v773 = vunpack.c.l.b16 %v734
    %v774 = vpack.c.b16 %v759, %v758
    %v775 = vpack.c.b16 %v761, %v760
    %v776 = vpack.c.b16 %v763, %v762
    %v777 = vpack.c.b16 %v765, %v764
    %v778 = vpack.c.b16 %v767, %v766
    %v779 = vpack.c.b16 %v769, %v768
    %v780 = vpack.c.b16 %v771, %v770
    %v781 = vpack.c.b16 %v773, %v772
    %790 = vmatprep.subr.bf16.mxu0 0
    %791 = vmatpush1.bf16.msra.mxu0 %v774
    %792 = vmatprep.subr.bf16.mxu0 0
    %793 = vmatpush1.bf16.msra.mxu0 %v775
    %794 = vmatprep.subr.bf16.mxu0 0
    %795 = vmatpush1.bf16.msra.mxu0 %v776
    %796 = vmatprep.subr.bf16.mxu0 0
    %797 = vmatpush1.bf16.msra.mxu0 %v777
    %798 = vmatprep.subr.bf16.mxu0 0
    %799 = vmatpush1.bf16.msra.mxu0 %v778
    %800 = vmatprep.subr.bf16.mxu0 0
    %801 = vmatpush1.bf16.msra.mxu0 %v779
    %802 = vmatprep.subr.bf16.mxu0 0
    %803 = vmatpush1.bf16.msra.mxu0 %v780
    %804 = vmatprep.subr.bf16.mxu0 0
    %805 = vmatpush1.bf16.msra.mxu0 %v781
    %806 = vmatprep.subr.bf16.mxu0 0
    %807 = vmatpush1.bf16.msra.mxu0 0
    %808 = vmatprep.subr.bf16.mxu0 0
    %809 = vmatpush1.bf16.msra.mxu0 0
    %810 = vmatprep.subr.bf16.mxu0 0
    %811 = vmatpush1.bf16.msra.mxu0 0
    %812 = vmatprep.subr.bf16.mxu0 0
    %813 = vmatpush1.bf16.msra.mxu0 0
    %814 = vmatprep.subr.bf16.mxu0 0
    %815 = vmatpush1.bf16.msra.mxu0 0
    %816 = vmatprep.subr.bf16.mxu0 0
    %817 = vmatpush1.bf16.msra.mxu0 0
    %818 = vmatprep.subr.bf16.mxu0 0
    %819 = vmatpush1.bf16.msra.mxu0 0
    %820 = vmatprep.subr.bf16.mxu0 0
    %821 = vmatpush1.bf16.msra.mxu0 0
    %822 = vmatprep.mubr.bf16.mxu0 0
    %823 = vmatmul.mubr.bf16.gmra.mrb[0].mxu0 %v718
    %v824 = vpop.f32.mrb[0].mxu0
    %v825 = vadd.f32 %v740, %v824
    %v826 = vpop.f32.mrb[0].mxu0
    %v827 = vpop.f32.mrb[0].mxu0
    %v828 = vpop.f32.mrb[0].mxu0
    %829 = vdwg.mxu0
    %v830 = vpack.c.bf16 %v825, %v825
    %831 = vst [vmem:[#allocation10] sm:$0xf] %v830
    // Predicated region
    $region46: #{tpu_custom_call.1} parent=1 // pred_check
      _
    $region47: #{tpu_custom_call.1} parent=1 // pred_check_branch
      %833 = sbr.rel (0) target = $region49
    $region48: #{tpu_custom_call.1} parent=1 // pred_region
      %s835 = ssub.s32 64, 64
      %836 = vsyncadd [#allocation4], %s835
      %s838 = sshll.u32 [#allocation10], 4
      %s839 = int_to_ptr.vmem [resolvable:$true] %s838
      %841 = dma.vmem_to_hbm [thread:$0]  %s839, 64, %s7, [#allocation4]
    $region49: #{tpu_custom_call.1} parent=1 // pred_fallthru
      _
    // Predicated region
    $region50: #{tpu_custom_call.1} parent=1 // pred_check
      _
    $region51: #{tpu_custom_call.1} parent=1 // pred_check_branch
      %843 = sbr.rel (0) target = $region53
    $region52: #{tpu_custom_call.1} parent=1 // pred_region
      %844 = dma.done [#allocation4], 64
    $region53: #{tpu_custom_call.1} parent=1 // pred_fallthru
      _
    %845 = vsyncpa [#allocation3], 1
    %846 = vsyncpa [#allocation6], 1
    %847 = vsyncpa [#allocation9], 1
    %848 = vsyncpa [#allocation4], 1

</llo_original>
